<compile_context>
chip_gen: v7x
topology: tpu7x:2x2x1
jax: 0.10.0
libtpu: 0.0.40
codegen_flags: <defaults>
</compile_context>

<pallas_src>
import jax
import jax.numpy as jnp
from jax.experimental import pallas as pl
from jax.experimental.pallas import tpu as pltpu

_LANE = 128
_SUBLANE = 8
_DEFAULT_VMEM_LIMIT = 64 * 1024 * 1024


def _round_up(n, m):
    return ((n + m - 1) // m) * m


def _pad2d(a, rows, cols):
    r, c = a.shape
    if r == rows and c == cols:
        return a
    return jnp.pad(a, ((0, rows - r), (0, cols - c)))


# ----------------------------- LayerNorm kernel -----------------------------

def _make_layernorm_kernel(dim, dim_padded, eps):
    inv_dim = 1.0 / float(dim)

    def kernel(x_ref, g_ref, b_ref, o_ref):
        x = x_ref[...].astype(jnp.float32)                # (tm, dim_padded)
        if dim == dim_padded:
            mean = jnp.sum(x, axis=-1, keepdims=True) * inv_dim
            centered = x - mean
        else:
            # Feature axis was zero-padded to a lane-dense width; mask the
            # padded lanes out of the statistics.
            lane = jax.lax.broadcasted_iota(jnp.int32, x.shape, 1)
            mask = (lane < dim).astype(jnp.float32)
            mean = jnp.sum(x * mask, axis=-1, keepdims=True) * inv_dim
            centered = (x - mean) * mask
        var = jnp.sum(centered * centered, axis=-1, keepdims=True) * inv_dim
        inv_std = jax.lax.rsqrt(var + eps)
        y = centered * inv_std * g_ref[...] + b_ref[...]
        o_ref[...] = y.astype(o_ref.dtype)

    return kernel


def layer_norm(x, weight, bias, *, eps=1e-5, tm=256,
               vmem_limit_bytes=_DEFAULT_VMEM_LIMIT):
    """torch.nn.LayerNorm over the last axis of x (biased variance, eps=1e-5)."""
    orig_shape = x.shape
    dim = orig_shape[-1]
    x2 = x.reshape(-1, dim)
    m = x2.shape[0]

    dim_p = _round_up(max(dim, _LANE), _LANE)             # lane-dense feature axis
    tm = min(tm, _round_up(m, _SUBLANE))                  # don't over-pad tiny inputs
    m_p = _round_up(m, tm)                                # padded rows -> no assert

    x2 = _pad2d(x2, m_p, dim_p)
    g2 = _pad2d(weight.astype(jnp.float32).reshape(1, dim), 1, dim_p)
    b2 = _pad2d(bias.astype(jnp.float32).reshape(1, dim), 1, dim_p)

    out = pl.pallas_call(
        _make_layernorm_kernel(dim, dim_p, eps),
        out_shape=jax.ShapeDtypeStruct((m_p, dim_p), x.dtype),
        grid_spec=pltpu.PrefetchScalarGridSpec(
            num_scalar_prefetch=0,
            grid=(m_p // tm,),
            in_specs=[
                pl.BlockSpec((tm, dim_p), lambda i: (i, 0)),   # streamed row tile
                pl.BlockSpec((1, dim_p), lambda i: (0, 0)),    # gamma, resident
                pl.BlockSpec((1, dim_p), lambda i: (0, 0)),    # beta, resident
            ],
            out_specs=pl.BlockSpec((tm, dim_p), lambda i: (i, 0)),
        ),
        compiler_params=pltpu.CompilerParams(
            dimension_semantics=("parallel",),
            vmem_limit_bytes=vmem_limit_bytes,
        ),
    )(x2, g2, b2)
    return out[:m, :dim].reshape(orig_shape)


# ----------------- demo `fn`: Linear(dim, dim) -> GELU kernel ----------------

def _ffn_kernel(x_ref, w_ref, b_ref, o_ref):
    # y = gelu(x @ W_t + b).  W_t was transposed once in the wrapper, so the
    # MXU sees a plain row-major matmul (no per-step in-kernel transpose).
    y = jnp.dot(x_ref[...], w_ref[...], preferred_element_type=jnp.float32)
    y = y + b_ref[...]
    y = jax.nn.gelu(y, approximate=False)      # matches torch.nn.GELU() (erf)
    o_ref[...] = y.astype(o_ref.dtype)


def feed_forward(x, weight, bias, *, tm=256, cast_bf16=False,
                 vmem_limit_bytes=_DEFAULT_VMEM_LIMIT):
    """x: (..., in_dim); weight: (out_dim, in_dim) [torch Linear]; bias: (out_dim,)."""
    orig_shape = x.shape
    in_dim = orig_shape[-1]
    out_dim = weight.shape[0]
    x2 = x.reshape(-1, in_dim)
    m = x2.shape[0]

    in_p = _round_up(max(in_dim, _LANE), _LANE)
    out_p = _round_up(max(out_dim, _LANE), _LANE)          # lane-dense output
    tm = min(tm, _round_up(m, _SUBLANE))
    m_p = _round_up(m, tm)

    x2 = _pad2d(x2, m_p, in_p)
    w_t = _pad2d(jnp.asarray(weight).T, in_p, out_p)       # transpose once, outside
    b2 = _pad2d(bias.astype(jnp.float32).reshape(1, out_dim), 1, out_p)

    if cast_bf16:   # v6e/v7x: bf16 operands, f32 MXU accumulation
        x2 = x2.astype(jnp.bfloat16)
        w_t = w_t.astype(jnp.bfloat16)

    # TODO(synk): for very large dims add K/N grid axes + a VMEM accumulator
    # (pl.when init/finalize) so the resident weight slice stays VMEM-bounded.
    out = pl.pallas_call(
        _ffn_kernel,
        out_shape=jax.ShapeDtypeStruct((m_p, out_p), x.dtype),
        grid_spec=pltpu.PrefetchScalarGridSpec(
            num_scalar_prefetch=0,
            grid=(m_p // tm,),
            in_specs=[
                pl.BlockSpec((tm, in_p), lambda i: (i, 0)),     # streamed row tile
                pl.BlockSpec((in_p, out_p), lambda i: (0, 0)),  # weight, resident
                pl.BlockSpec((1, out_p), lambda i: (0, 0)),     # bias, resident
            ],
            out_specs=pl.BlockSpec((tm, out_p), lambda i: (i, 0)),
        ),
        compiler_params=pltpu.CompilerParams(
            dimension_semantics=("parallel",),
            vmem_limit_bytes=vmem_limit_bytes,
        ),
    )(x2, w_t, b2)
    return out[:m, :out_dim].reshape(orig_shape[:-1] + (out_dim,))


# ------------------------------ PreNorm wrapper -----------------------------

def pre_norm(x, fn, norm_weight, norm_bias, *, context=None,
             context_norm_weight=None, context_norm_bias=None,
             eps=1e-5, **kwargs):
    """PreNorm.forward: x = LN(x); optionally kwargs['context'] = LN_ctx(context)."""
    x = layer_norm(x, norm_weight, norm_bias, eps=eps)
    if context is not None:
        kwargs["context"] = layer_norm(
            context, context_norm_weight, context_norm_bias, eps=eps)
    return fn(x, **kwargs)


# --------------------------------- reference --------------------------------

def _layer_norm_ref(x, g, b, eps=1e-5):
    mean = x.mean(-1, keepdims=True)
    var = ((x - mean) ** 2).mean(-1, keepdims=True)
    return (x - mean) / jnp.sqrt(var + eps) * g + b


if __name__ == "__main__":
    batch, seq, dim = 2, 8, 32
    ctx_len, context_dim = 6, 48

    key = jax.random.PRNGKey(0)
    kx, kg, kb, kw, kfb, kc, kcg, kcb = jax.random.split(key, 8)

    x = jax.random.normal(kx, (batch, seq, dim), dtype=jnp.float32)

    # PreNorm's own parameters (LayerNorm affine; perturbed from ones/zeros).
    ln_w = 1.0 + 0.05 * jax.random.normal(kg, (dim,), dtype=jnp.float32)
    ln_b = 0.05 * jax.random.normal(kb, (dim,), dtype=jnp.float32)

    # Wrapped fn: Linear(dim, dim) -> GELU (Pallas kernel as well).
    scale = (2.0 / (dim + dim)) ** 0.5
    ff_w = scale * jax.random.normal(kw, (dim, dim), dtype=jnp.float32)
    ff_b = 0.01 * jax.random.normal(kfb, (dim,), dtype=jnp.float32)

    out = pre_norm(x, lambda t: feed_forward(t, ff_w, ff_b), ln_w, ln_b)
    out = jax.block_until_ready(out)

    ref = jax.nn.gelu(
        jnp.einsum("...d,ed->...e", _layer_norm_ref(x, ln_w, ln_b), ff_w) + ff_b,
        approximate=False)
    assert out.shape == x.shape
    assert jnp.allclose(out, ref, atol=1e-4, rtol=1e-4), "PreNorm(fn) mismatch"

    # Exercise the optional context-normalization path of PreNorm.
    context = jax.random.normal(kc, (batch, ctx_len, context_dim), dtype=jnp.float32)
    ctx_w = 1.0 + 0.05 * jax.random.normal(kcg, (context_dim,), dtype=jnp.float32)
    ctx_b = 0.05 * jax.random.normal(kcb, (context_dim,), dtype=jnp.float32)

    out_x, out_ctx = pre_norm(
        x, lambda t, context=None: (t, context), ln_w, ln_b,
        context=context, context_norm_weight=ctx_w, context_norm_bias=ctx_b)
    jax.block_until_ready(out_ctx)

    assert jnp.allclose(out_x, _layer_norm_ref(x, ln_w, ln_b), atol=1e-4, rtol=1e-4)
    assert jnp.allclose(out_ctx, _layer_norm_ref(context, ctx_w, ctx_b),
                        atol=1e-4, rtol=1e-4)

    print("KERNEL_OK")
</pallas_src>

<mosaic_0001>
module attributes {stable_mosaic.version = 11 : i64} {
  func.func @kernel(%arg0: i32, %arg1: memref<16x128xf32, #tpu.memory_space<vmem>>, %arg2: memref<1x128xf32, #tpu.memory_space<vmem>>, %arg3: memref<1x128xf32, #tpu.memory_space<vmem>>, %arg4: memref<16x128xf32, #tpu.memory_space<vmem>>) attributes {dimension_semantics = [#tpu.dimension_semantics<parallel>], iteration_bounds = array<i64: 1>, scalar_prefetch = 0 : i64, scratch_operands = 0 : i64, tpu.core_type = #tpu.core_type<tc>, window_params = [{transform_indices = @transform_0, window_bounds = array<i64: 16, 128>}, {pipeline_mode = #tpu.pipeline_mode<synchronous>, transform_indices = @transform_1, window_bounds = array<i64: 1, 128>}, {pipeline_mode = #tpu.pipeline_mode<synchronous>, transform_indices = @transform_2, window_bounds = array<i64: 1, 128>}, {transform_indices = @transform_3, window_bounds = array<i64: 16, 128>}]} {
    %c0 = arith.constant 0 : index
    %c0_0 = arith.constant 0 : index
    %0 = vector.load %arg1[%c0, %c0_0] : memref<16x128xf32, #tpu.memory_space<vmem>>, vector<16x128xf32>
    %1 = tpu.iota {dimensions = array<i32: 1>} : vector<16x128xi32>
    %c32_i32 = arith.constant 32 : i32
    %2 = vector.broadcast %c32_i32 : i32 to vector<16x128xi32>
    %3 = arith.cmpi slt, %1, %2 : vector<16x128xi32>
    %4 = arith.extui %3 : vector<16x128xi1> to vector<16x128xi32>
    %5 = arith.sitofp %4 : vector<16x128xi32> to vector<16x128xf32>
    %6 = arith.mulf %0, %5 : vector<16x128xf32>
    %cst = arith.constant dense<0.000000e+00> : vector<16xf32>
    %7 = vector.multi_reduction <add>, %6, %cst [1] : vector<16x128xf32> to vector<16xf32>
    %8 = vector.shape_cast %7 : vector<16xf32> to vector<16x1xf32>
    %cst_1 = arith.constant 3.125000e-02 : f32
    %9 = vector.broadcast %cst_1 : f32 to vector<16x1xf32>
    %10 = arith.mulf %8, %9 : vector<16x1xf32>
    %11 = vector.broadcast %10 : vector<16x1xf32> to vector<16x128xf32>
    %12 = arith.subf %0, %11 : vector<16x128xf32>
    %13 = arith.mulf %12, %5 : vector<16x128xf32>
    %14 = arith.mulf %13, %13 : vector<16x128xf32>
    %cst_2 = arith.constant dense<0.000000e+00> : vector<16xf32>
    %15 = vector.multi_reduction <add>, %14, %cst_2 [1] : vector<16x128xf32> to vector<16xf32>
    %16 = vector.shape_cast %15 : vector<16xf32> to vector<16x1xf32>
    %cst_3 = arith.constant 3.125000e-02 : f32
    %17 = vector.broadcast %cst_3 : f32 to vector<16x1xf32>
    %18 = arith.mulf %16, %17 : vector<16x1xf32>
    %cst_4 = arith.constant 9.99999974E-6 : f32
    %19 = vector.broadcast %cst_4 : f32 to vector<16x1xf32>
    %20 = arith.addf %18, %19 : vector<16x1xf32>
    %21 = math.rsqrt %20 : vector<16x1xf32>
    %22 = vector.broadcast %21 : vector<16x1xf32> to vector<16x128xf32>
    %23 = arith.mulf %13, %22 : vector<16x128xf32>
    %c0_5 = arith.constant 0 : index
    %c0_6 = arith.constant 0 : index
    %24 = vector.load %arg2[%c0_5, %c0_6] : memref<1x128xf32, #tpu.memory_space<vmem>>, vector<1x128xf32>
    %25 = vector.broadcast %24 : vector<1x128xf32> to vector<16x128xf32>
    %26 = arith.mulf %23, %25 : vector<16x128xf32>
    %c0_7 = arith.constant 0 : index
    %c0_8 = arith.constant 0 : index
    %27 = vector.load %arg3[%c0_7, %c0_8] : memref<1x128xf32, #tpu.memory_space<vmem>>, vector<1x128xf32>
    %28 = vector.broadcast %27 : vector<1x128xf32> to vector<16x128xf32>
    %29 = arith.addf %26, %28 : vector<16x128xf32>
    %c0_9 = arith.constant 0 : index
    %c0_10 = arith.constant 0 : index
    %30 = vector.load %arg4[%c0_9, %c0_10] : memref<16x128xf32, #tpu.memory_space<vmem>>, vector<16x128xf32>
    tpu.vector_store %arg4[%c0_9, %c0_10], %29 {strides = array<i32>} : memref<16x128xf32, #tpu.memory_space<vmem>>, vector<16x128xf32>,
    return
  }
  func.func @transform_0(%arg0: i32) -> (i32, i32) {
    %c0_i32 = arith.constant 0 : i32
    %c0_i32_0 = arith.constant 0 : i32
    return %arg0, %c0_i32 : i32, i32
  }
  func.func @transform_1(%arg0: i32) -> (i32, i32) {
    %c0_i32 = arith.constant 0 : i32
    %c0_i32_0 = arith.constant 0 : i32
    %c0_i32_1 = arith.constant 0 : i32
    return %c0_i32, %c0_i32_0 : i32, i32
  }
  func.func @transform_2(%arg0: i32) -> (i32, i32) {
    %c0_i32 = arith.constant 0 : i32
    %c0_i32_0 = arith.constant 0 : i32
    %c0_i32_1 = arith.constant 0 : i32
    return %c0_i32, %c0_i32_0 : i32, i32
  }
  func.func @transform_3(%arg0: i32) -> (i32, i32) {
    %c0_i32 = arith.constant 0 : i32
    %c0_i32_0 = arith.constant 0 : i32
    return %arg0, %c0_i32 : i32, i32
  }
}

</mosaic_0001>

<llo_original>
// kernel: tpu_custom_call.1
$region0: #{tpu_custom_call.1}
  #allocation0 [shape = 'u32[]', space=smem, size = 0x4, offset = 0x4, fixed_abs, tag = 'smem constant byte address 0x4 - core index']
  #allocation1 [shape = 'u32[144,128]{1,0:T(1,128)}', space=vmem, size = 0x12000, scoped, tag = 'internal scratch']
  %s0 = inlined_call_operand.hbm [shape: f32[16,128], index: 0, kind: input, shape index: {}]
  %s1 = inlined_call_operand.hbm [shape: f32[1,128], index: 1, kind: input, shape index: {}]
  %s2 = inlined_call_operand.hbm [shape: f32[1,128], index: 2, kind: input, shape index: {}]
  %s3 = inlined_call_operand.hbm [shape: f32[16,128], index: 3, kind: output, shape index: {}]
  %s4 = sld [smem:[#allocation0]]
  $region34: #{tpu_custom_call.1} parent=0
    _
  %s6 = ssub.s32 1, %s4
  %s7 = scalar_select 0, %s6, %s4
  $region1: #{tpu_custom_call.1} parent=0
    #allocation2 [shape = 'u8[8192]{0}', space=vmem, size = 0x2000, scoped, tag = 'input window, operand 0, single buffered']
    #allocation3 [shape = 's32[1]{0}', space=sflag, size = 0x4, scoped, tag = 'scoped memory for tpu_custom_call.1']
    #allocation4 [shape = 's32[1]{0}', space=sflag, size = 0x4, scoped, tag = 'scoped memory for tpu_custom_call.1']
    #allocation5 [shape = 'u8[512]{0}', space=vmem, size = 0x400, scoped, tag = 'input window, operand 1, single buffered']
    #allocation6 [shape = 's32[1]{0}', space=sflag, size = 0x4, scoped, tag = 'scoped memory for tpu_custom_call.1']
    #allocation7 [shape = 'u8[512]{0}', space=vmem, size = 0x400, scoped, tag = 'input window, operand 2, single buffered']
    #allocation8 [shape = 'u8[8192]{0}', space=vmem, size = 0x2000, scoped, tag = 'output window, operand 0, single buffered']
    %8 = vsyncpa [#allocation3], 0
    %9 = vsyncpa [#allocation6], 0
    %10 = vsyncpa [#allocation4], 0
    // Predicated region
    $region2: #{tpu_custom_call.1} parent=1 // pred_check
      _
    $region3: #{tpu_custom_call.1} parent=1 // pred_check_branch
      %12 = sbr.rel (0) target = $region5
    $region4: #{tpu_custom_call.1} parent=1 // pred_region
      %s14 = ssub.s32 256, 256
      %15 = vsyncadd [#allocation3], %s14
      %s16 = sshll.u32 [#allocation2], 4
      %s17 = int_to_ptr.vmem [resolvable:$true] %s16
      %22 = dma.hbm_to_vmem [thread:$0]  %s0, 256, %s17, [#allocation3], 128, 128, 8
    $region5: #{tpu_custom_call.1} parent=1 // pred_fallthru
      _
    // Predicated region
    $region6: #{tpu_custom_call.1} parent=1 // pred_check
      _
    $region7: #{tpu_custom_call.1} parent=1 // pred_check_branch
      %24 = sbr.rel (0) target = $region9
    $region8: #{tpu_custom_call.1} parent=1 // pred_region
      %s26 = ssub.s32 16, 16
      %27 = vsyncadd [#allocation6], %s26
      %s29 = sshll.u32 [#allocation5], 4
      %s30 = int_to_ptr.vmem [resolvable:$true] %s29
      %32 = dma.hbm_to_vmem [thread:$0]  %s1, 16, %s30, [#allocation6]
    $region9: #{tpu_custom_call.1} parent=1 // pred_fallthru
      _
    // Predicated region
    $region10: #{tpu_custom_call.1} parent=1 // pred_check
      _
    $region11: #{tpu_custom_call.1} parent=1 // pred_check_branch
      %34 = sbr.rel (0) target = $region13
    $region12: #{tpu_custom_call.1} parent=1 // pred_region
      %s36 = ssub.s32 16, 16
      %37 = vsyncadd [#allocation6], %s36
      %s39 = sshll.u32 [#allocation7], 4
      %s40 = int_to_ptr.vmem [resolvable:$true] %s39
      %42 = dma.hbm_to_vmem [thread:$0]  %s2, 16, %s40, [#allocation6]
    $region13: #{tpu_custom_call.1} parent=1 // pred_fallthru
      _
    // Predicated region
    $region14: #{tpu_custom_call.1} parent=1 // pred_check
      _
    $region15: #{tpu_custom_call.1} parent=1 // pred_check_branch
      %44 = sbr.rel (0) target = $region17
    $region16: #{tpu_custom_call.1} parent=1 // pred_region
      %45 = dma.done [#allocation3], 256
    $region17: #{tpu_custom_call.1} parent=1 // pred_fallthru
      _
    // Predicated region
    $region18: #{tpu_custom_call.1} parent=1 // pred_check
      _
    $region19: #{tpu_custom_call.1} parent=1 // pred_check_branch
      %47 = sbr.rel (0) target = $region21
    $region20: #{tpu_custom_call.1} parent=1 // pred_region
      %48 = dma.done [#allocation6], 16
    $region21: #{tpu_custom_call.1} parent=1 // pred_fallthru
      _
    // Predicated region
    $region22: #{tpu_custom_call.1} parent=1 // pred_check
      _
    $region23: #{tpu_custom_call.1} parent=1 // pred_check_branch
      %50 = sbr.rel (0) target = $region25
    $region24: #{tpu_custom_call.1} parent=1 // pred_region
      %51 = dma.done [#allocation6], 16
    $region25: #{tpu_custom_call.1} parent=1 // pred_fallthru
      _
    %v52 = vld [vmem:[#allocation2] sm:$0xff]
    %v53 = vld [vmem:[#allocation2 + $0x8] sm:$0xff]
    %v54 = vlaneseq
    %v55 = vand.u32 %v54, 127
    %vm56 = vcmp.lt.s32.totalorder %v55, 32
    %v57 = vsel %vm56, 1, 0
    %v58 = vcvt.s32.f32 %v57
    %v59 = vmul.f32 %v52, %v58
    %v60 = vmul.f32 %v53, %v58
    %61 = vadd.xlane.f32.xlu0 %v59
    %v62 = vpop.xlane.xlu0 %61
    %63 = vadd.xlane.f32.xlu0 %v60
    %v64 = vpop.xlane.xlu0 %63
    %v65 = vmul.f32 %v62, 0.03125
    %v66 = vmul.f32 %v64, 0.03125
    %v67 = vsub.f32 %v52, %v65
    %v68 = vsub.f32 %v53, %v66
    %v69 = vmul.f32 %v67, %v58
    %v70 = vmul.f32 %v68, %v58
    %v71 = vmul.f32 %v69, %v69
    %v72 = vmul.f32 %v70, %v70
    %73 = vadd.xlane.f32.xlu0 %v71
    %v74 = vpop.xlane.xlu0 %73
    %75 = vadd.xlane.f32.xlu0 %v72
    %v76 = vpop.xlane.xlu0 %75
    %v77 = vmul.f32 %v74, 0.03125
    %v78 = vmul.f32 %v76, 0.03125
    %v79 = vadd.f32 %v77, 1e-05
    %v80 = vadd.f32 %v78, 1e-05
    %v81 = vrsqrt.pop %v79
    %v82 = vrsqrt.pop %v80
    %v83 = vmul.f32 %v69, %v81
    %v84 = vmul.f32 %v70, %v82
    %v85 = vld [vmem:[#allocation5] sm:$0x1]
    %v87 = vlaneseq
    %v88 = vshrl.u32 %v87, 7
    %v89 = vsub.s32 0, %v88
    %v90 = vrot.slane %v85, %v89
    %v92 = vmul.f32 %v83, %v90
    %v93 = vmul.f32 %v84, %v90
    %v94 = vld [vmem:[#allocation7] sm:$0x1]
    %v96 = vlaneseq
    %v97 = vshrl.u32 %v96, 7
    %v98 = vsub.s32 0, %v97
    %v99 = vrot.slane %v94, %v98
    %v101 = vadd.f32 %v92, %v99
    %v102 = vadd.f32 %v93, %v99
    %103 = vst [vmem:[#allocation8] sm:$0xff] %v101
    %104 = vst [vmem:[#allocation8 + $0x8] sm:$0xff] %v102
    // Predicated region
    $region26: #{tpu_custom_call.1} parent=1 // pred_check
      _
    $region27: #{tpu_custom_call.1} parent=1 // pred_check_branch
      %106 = sbr.rel (0) target = $region29
    $region28: #{tpu_custom_call.1} parent=1 // pred_region
      %s108 = ssub.s32 256, 256
      %109 = vsyncadd [#allocation4], %s108
      %s110 = sshll.u32 [#allocation8], 4
      %s111 = int_to_ptr.vmem [resolvable:$true] %s110
      %116 = dma.vmem_to_hbm [thread:$0]  %s111, 256, %s3, [#allocation4], 128, 128, 8
    $region29: #{tpu_custom_call.1} parent=1 // pred_fallthru
      _
    // Predicated region
    $region30: #{tpu_custom_call.1} parent=1 // pred_check
      _
    $region31: #{tpu_custom_call.1} parent=1 // pred_check_branch
      %118 = sbr.rel (0) target = $region33
    $region32: #{tpu_custom_call.1} parent=1 // pred_region
      %119 = dma.done [#allocation4], 256
    $region33: #{tpu_custom_call.1} parent=1 // pred_fallthru
      _
    %120 = vsyncpa [#allocation3], 1
    %121 = vsyncpa [#allocation6], 1
    %122 = vsyncpa [#allocation4], 1

</llo_original>
